<compile_context>
chip_gen: v6e
topology: v6e:2x2x1
jax: 0.10.0
libtpu: 0.0.40
codegen_flags: <defaults>
</compile_context>

<pallas_src>
import math

import jax
import jax.numpy as jnp
from jax.experimental import pallas as pl
from jax.experimental.pallas import tpu as pltpu

SQRT2 = math.sqrt(2.0)

_TARGET_TILE_BYTES = 4 * 1024 * 1024   # ~4 MiB/tile -> 16 MiB resident (in+out, double buffered)
_VMEM_LIMIT_BYTES = 32 * 1024 * 1024   # raise v5e's 16 MiB scoped default; safe on every chip
_MIN_PALLAS_BYTES = 1 << 20            # below ~1 MiB a fused XLA elementwise pass wins


def _round_up(x: int, m: int) -> int:
    return ((x + m - 1) // m) * m


def _device_kind() -> str:
    try:
        return jax.devices()[0].device_kind.lower()
    except Exception:
        return ""


def _prefers_f32_compute() -> bool:
    # v5e and older have no bf16 VPU/EUP -> compute in f32 there (and when unknown).
    kind = _device_kind()
    if not kind:
        return True
    return any(tag in kind for tag in ("v2", "v3", "v4", "v5"))


def _tensorcores_per_chip() -> int:
    # Only v7x-class chips expose 2 TensorCores per chip; default to 1 (no tile shrink).
    kind = _device_kind()
    return 2 if ("v7" in kind or "7x" in kind) else 1


def _make_kernel(compute_dtype):
    def kernel(alpha_ref, x_ref, o_ref):
        # alpha_ref: SMEM f32 scalar (1,); x_ref / o_ref: VMEM tiles (block_rows, lanes).
        alpha = alpha_ref[0].astype(compute_dtype)       # learned scalar, stored f32
        x = x_ref[...].astype(compute_dtype)             # bf16-native on v6e/v7x, f32 otherwise
        o_ref[...] = (jnp.tanh(x * alpha) * SQRT2).astype(o_ref.dtype)
    return kernel


def scaled_tanh(x: jax.Array, alpha: jax.Array, *, force_pallas: bool = False) -> jax.Array:
    """tanh(x * alpha) * sqrt(2), elementwise. Works for any shape/dtype."""
    orig_shape = x.shape
    dtype = x.dtype
    n = x.size
    itemsize = dtype.itemsize
    alpha_f32 = jnp.asarray(alpha, jnp.float32)

    ragged = (n % 128) != 0
    tiny = (n * itemsize) < _MIN_PALLAS_BYTES
    if n == 0 or ragged or (tiny and not force_pallas):
        # One fused XLA elementwise pass: optimal HBM traffic; avoids the old
        # pad + slice path (2 extra full HBM passes) and kernel-launch overhead.
        return (jnp.tanh(x.astype(jnp.float32) * alpha_f32) * SQRT2).astype(dtype)

    # Lane-dense 2D slab: widest lane count that divides numel (>= 128 guaranteed here).
    lanes = 128
    for cand in (8192, 4096, 2048, 1024, 512, 256):
        if n % cand == 0:
            lanes = cand
            break
    rows = n // lanes
    x2d = x.reshape(rows, lanes)

    # Sublane packing multiple: 8 for 4-byte, 16 for 2-byte, 32 for 1-byte dtypes.
    sub = max(8, 32 // max(1, itemsize))
    target_rows = max(sub, (_TARGET_TILE_BYTES // (lanes * itemsize)) // sub * sub)
    block_rows = target_rows
    ncores = _tensorcores_per_chip()
    if ncores > 1:
        # Ensure at least `ncores` grid steps (when possible) so both v7x TCs get work;
        # never applied on single-TC chips (it would only shrink tiles).
        block_rows = min(block_rows, _round_up(pl.cdiv(rows, ncores), sub))
    if block_rows >= rows:
        block_rows = rows  # single full-extent block (always legal)
    grid = (pl.cdiv(rows, block_rows),)  # partial last block is write-masked by Pallas

    # Compute dtype: bf16/f16-native on bf16-capable VPU/EUP chips, f32 otherwise.
    compute_dtype = jnp.float32
    if (dtype == jnp.bfloat16 or dtype == jnp.float16) and not _prefers_f32_compute():
        compute_dtype = dtype

    out2d = pl.pallas_call(
        _make_kernel(compute_dtype),
        out_shape=jax.ShapeDtypeStruct((rows, lanes), dtype),
        grid_spec=pltpu.PrefetchScalarGridSpec(
            num_scalar_prefetch=0,
            grid=grid,
            in_specs=[
                pl.BlockSpec(memory_space=pltpu.MemorySpace.SMEM),    # alpha scalar (f32)
                pl.BlockSpec((block_rows, lanes), lambda i: (i, 0)),  # x tile
            ],
            out_specs=pl.BlockSpec((block_rows, lanes), lambda i: (i, 0)),
        ),
        input_output_aliases={1: 0},  # in-place when the caller donates x
        compiler_params=pltpu.CompilerParams(
            dimension_semantics=("parallel",),
            vmem_limit_bytes=_VMEM_LIMIT_BYTES,
        ),
    )(alpha_f32.reshape(1), x2d)

    return out2d.reshape(orig_shape)


if __name__ == "__main__":
    # Deterministic parameter init matching nn.Parameter(torch.tensor(1.0)).
    alpha = jnp.float32(1.0)

    # 1) Small NCHW-shaped input consistent with a conv-style feature map; force the
    #    Pallas path so the kernel itself is exercised at demo scale.
    x = jax.random.normal(jax.random.PRNGKey(0), (2, 4, 16, 16), dtype=jnp.float32)
    ref = jnp.tanh(x * alpha) * SQRT2
    out = jax.block_until_ready(scaled_tanh(x, alpha, force_pallas=True))
    assert out.shape == x.shape and out.dtype == x.dtype
    assert jnp.allclose(out, ref, atol=1e-6, rtol=1e-6), "mismatch vs reference (f32 small)"

    # 2) Larger f32 slab: natural Pallas path with a multi-step grid.
    x1 = jax.random.normal(jax.random.PRNGKey(1), (16, 16, 64, 128), dtype=jnp.float32)
    ref1 = jnp.tanh(x1 * 0.7) * SQRT2
    out1 = jax.block_until_ready(scaled_tanh(x1, jnp.float32(0.7)))
    assert jnp.allclose(out1, ref1, atol=1e-6, rtol=1e-6), "mismatch vs reference (f32 large)"

    # 3) Odd-sized input: ragged fallback (one fused XLA pass; no pad + slice passes).
    x2 = jax.random.normal(jax.random.PRNGKey(2), (3, 5, 7, 11), dtype=jnp.float32)
    ref2 = jnp.tanh(x2 * 0.7) * SQRT2
    out2 = jax.block_until_ready(scaled_tanh(x2, jnp.float32(0.7)))
    assert out2.shape == x2.shape
    assert jnp.allclose(out2, ref2, atol=1e-6, rtol=1e-6), "mismatch vs reference (ragged)"

    # 4) bf16-on-the-wire path (bf16 compute on v6e/v7x, f32 compute on v5e and older).
    x3 = jax.random.normal(jax.random.PRNGKey(3), (16, 16, 64, 128), dtype=jnp.bfloat16)
    ref3 = (jnp.tanh(x3.astype(jnp.float32) * 1.0) * SQRT2).astype(jnp.bfloat16)
    out3 = jax.block_until_ready(scaled_tanh(x3, alpha))
    assert out3.dtype == jnp.bfloat16
    assert jnp.allclose(out3.astype(jnp.float32), ref3.astype(jnp.float32),
                        atol=2e-2, rtol=2e-2), "mismatch vs reference (bf16)"

    print("KERNEL_OK")
</pallas_src>

<mosaic_0001>
module attributes {stable_mosaic.version = 11 : i64} {
  func.func @kernel(%arg0: i32, %arg1: memref<1xf32, #tpu.memory_space<smem>>, %arg2: memref<1x2048xf32, #tpu.memory_space<vmem>>, %arg3: memref<1x2048xf32, #tpu.memory_space<vmem>>) attributes {dimension_semantics = [#tpu.dimension_semantics<parallel>], iteration_bounds = array<i64: 1>, scalar_prefetch = 0 : i64, scratch_operands = 0 : i64, tpu.core_type = #tpu.core_type<tc>, window_params = [{transform_indices = @transform_0, window_bounds = array<i64: 1>}, {transform_indices = @transform_1, window_bounds = array<i64: 1, 2048>}, {transform_indices = @transform_2, window_bounds = array<i64: 1, 2048>}]} {
    %c0 = arith.constant 0 : index
    %0 = memref.load %arg1[%c0] : memref<1xf32, #tpu.memory_space<smem>>
    %c0_0 = arith.constant 0 : index
    %c0_1 = arith.constant 0 : index
    %1 = vector.load %arg2[%c0_0, %c0_1] : memref<1x2048xf32, #tpu.memory_space<vmem>>, vector<1x2048xf32>
    %2 = vector.broadcast %0 : f32 to vector<1x2048xf32>
    %3 = arith.mulf %1, %2 : vector<1x2048xf32>
    %4 = math.tanh %3 : vector<1x2048xf32>
    %cst = arith.constant 1.41421354 : f32
    %5 = vector.broadcast %cst : f32 to vector<1x2048xf32>
    %6 = arith.mulf %4, %5 : vector<1x2048xf32>
    %c0_2 = arith.constant 0 : index
    %c0_3 = arith.constant 0 : index
    %7 = vector.load %arg3[%c0_2, %c0_3] : memref<1x2048xf32, #tpu.memory_space<vmem>>, vector<1x2048xf32>
    tpu.vector_store %arg3[%c0_2, %c0_3], %6 {strides = array<i32>} : memref<1x2048xf32, #tpu.memory_space<vmem>>, vector<1x2048xf32>,
    return
  }
  func.func @transform_0(%arg0: i32) -> i32 {
    %c0_i32 = arith.constant 0 : i32
    %c0_i32_0 = arith.constant 0 : i32
    return %c0_i32 : i32
  }
  func.func @transform_1(%arg0: i32) -> (i32, i32) {
    %c0_i32 = arith.constant 0 : i32
    %c0_i32_0 = arith.constant 0 : i32
    return %arg0, %c0_i32 : i32, i32
  }
  func.func @transform_2(%arg0: i32) -> (i32, i32) {
    %c0_i32 = arith.constant 0 : i32
    %c0_i32_0 = arith.constant 0 : i32
    return %arg0, %c0_i32 : i32, i32
  }
}

</mosaic_0001>

<llo_original>
// kernel: tpu_custom_call.1
$region0: #{tpu_custom_call.1}
  #allocation0 [shape = 'u32[]', space=smem, size = 0x4, offset = 0x4, fixed_abs, tag = 'smem constant byte address 0x4 - core index']
  #allocation1 [shape = 'u32[144,128]{1,0:T(1,128)}', space=vmem, size = 0x12000, scoped, tag = 'internal scratch']
  #allocation2 [shape = 'f32[1]{0:T(128)S(6)}', space=smem, size = 0x200, scoped, tag = 'scoped memory for tpu_custom_call.1']
  %s0 = inlined_call_operand.<no memory space> [shape: f32[1], index: 0, kind: input, shape index: {}]
  %s1 = inlined_call_operand.hbm [shape: f32[1,2048], index: 1, kind: input, shape index: {}, may-alias: {1,2}]
  %s2 = inlined_call_operand.hbm [shape: f32[1,2048], index: 2, kind: output, shape index: {}, may-alias: {1,2}]
  %s3 = sld [smem:[#allocation0]]
  $region22: #{tpu_custom_call.1} parent=0
    _
  %s5 = ssub.s32 1, %s3
  %s6 = scalar_select 0, %s5, %s3
  %7 = sst [smem:[#allocation2]] %s0
  $region1: #{tpu_custom_call.1} parent=0
    #allocation3 [shape = 'u8[8192]{0}', space=vmem, size = 0x2000, scoped, tag = 'input window, operand 1, single buffered']
    #allocation4 [shape = 's32[1]{0}', space=sflag, size = 0x4, scoped, tag = 'scoped memory for tpu_custom_call.1']
    #allocation5 [shape = 's32[1]{0}', space=sflag, size = 0x4, scoped, tag = 'scoped memory for tpu_custom_call.1']
    #allocation6 [shape = 'u8[8192]{0}', space=vmem, size = 0x2000, scoped, tag = 'output window, operand 0, single buffered']
    %8 = vsyncpa [#allocation4], 0
    %9 = vsyncpa [#allocation5], 0
    // Predicated region
    $region2: #{tpu_custom_call.1} parent=1 // pred_check
      _
    $region3: #{tpu_custom_call.1} parent=1 // pred_check_branch
      %11 = sbr.rel (0) target = $region5
    $region4: #{tpu_custom_call.1} parent=1 // pred_region
      _
    $region5: #{tpu_custom_call.1} parent=1 // pred_fallthru
      _
    // Predicated region
    $region6: #{tpu_custom_call.1} parent=1 // pred_check
      _
    $region7: #{tpu_custom_call.1} parent=1 // pred_check_branch
      %13 = sbr.rel (0) target = $region9
    $region8: #{tpu_custom_call.1} parent=1 // pred_region
      %s15 = ssub.s32 256, 256
      %16 = vsyncadd [#allocation4], %s15
      %s18 = sshll.u32 [#allocation3], 4
      %s19 = int_to_ptr.vmem [resolvable:$true] %s18
      %21 = dma.hbm_to_vmem [thread:$0]  %s1, 256, %s19, [#allocation4]
    $region9: #{tpu_custom_call.1} parent=1 // pred_fallthru
      _
    // Predicated region
    $region10: #{tpu_custom_call.1} parent=1 // pred_check
      _
    $region11: #{tpu_custom_call.1} parent=1 // pred_check_branch
      %23 = sbr.rel (0) target = $region13
    $region12: #{tpu_custom_call.1} parent=1 // pred_region
      %24 = dma.done [#allocation4], 256
    $region13: #{tpu_custom_call.1} parent=1 // pred_fallthru
      _
    %s25 = sld [smem:[#allocation2]]
    %v26 = vld [vmem:[#allocation3] sm:$0xff]
    %v27 = vld [vmem:[#allocation3 + $0x8] sm:$0xff]
    %v28 = vstv %s25
    %v29 = vmul.f32 %v26, %v28
    %v30 = vmul.f32 %v27, %v28
    %v31 = vtanh.pop %v29
    %v32 = vtanh.pop %v30
    %v33 = vmul.f32 %v31, 1.4142135
    %v34 = vmul.f32 %v32, 1.4142135
    %35 = vst [vmem:[#allocation6] sm:$0xff] %v33
    %36 = vst [vmem:[#allocation6 + $0x8] sm:$0xff] %v34
    // Predicated region
    $region14: #{tpu_custom_call.1} parent=1 // pred_check
      _
    $region15: #{tpu_custom_call.1} parent=1 // pred_check_branch
      %38 = sbr.rel (0) target = $region17
    $region16: #{tpu_custom_call.1} parent=1 // pred_region
      %s40 = ssub.s32 256, 256
      %41 = vsyncadd [#allocation5], %s40
      %s43 = sshll.u32 [#allocation6], 4
      %s44 = int_to_ptr.vmem [resolvable:$true] %s43
      %46 = dma.vmem_to_hbm [thread:$0]  %s44, 256, %s2, [#allocation5]
    $region17: #{tpu_custom_call.1} parent=1 // pred_fallthru
      _
    // Predicated region
    $region18: #{tpu_custom_call.1} parent=1 // pred_check
      _
    $region19: #{tpu_custom_call.1} parent=1 // pred_check_branch
      %48 = sbr.rel (0) target = $region21
    $region20: #{tpu_custom_call.1} parent=1 // pred_region
      %49 = dma.done [#allocation5], 256
    $region21: #{tpu_custom_call.1} parent=1 // pred_fallthru
      _
    %50 = vsyncpa [#allocation4], 1
    %51 = vsyncpa [#allocation5], 1

</llo_original>
